<compile_context>
chip_gen: v7x
topology: tpu7x:2x2x1
jax: 0.10.0
libtpu: 0.0.40
codegen_flags: <defaults>
</compile_context>

<pallas_src>
import jax
import jax.numpy as jnp
from jax.experimental import pallas as pl
from jax.experimental.pallas import tpu as pltpu


def _round_up(x, m):
    return (x + m - 1) // m * m


def _cdiv(a, b):
    return (a + b - 1) // b


# ---------------------------------------------------------------------------
# Kernels
# ---------------------------------------------------------------------------

def swiglu_kernel_acc(x_ref, wgu_ref, wd_ref, o_ref, acc_ref):
    # x_ref:   (tm, D)       token tile (resident across the H axis)
    # wgu_ref: (D, 2*th)     interleaved [gate_tile | up_tile] weights, step h
    # wd_ref:  (th, D)       down-projection weight tile, step h
    # o_ref:   (tm, D)       output tile (written on the last h step only)
    # acc_ref: (tm, D) f32   VMEM accumulator across the H reduction axis
    h_step = pl.program_id(1)

    @pl.when(h_step == 0)
    def _():
        acc_ref[...] = jnp.zeros_like(acc_ref)

    x = x_ref[...]
    # Single fused MXU pass for gate and up projections.
    gu = jnp.dot(x, wgu_ref[...], preferred_element_type=jnp.float32)  # (tm, 2*th)
    th = gu.shape[-1] // 2
    gate = gu[:, :th]          # lane-aligned split (th is a multiple of 128)
    up = gu[:, th:]
    # SiLU(gate) * up in f32 (sigmoid on EUP), downcast only for the MXU feed.
    hidden = (gate * jax.nn.sigmoid(gate) * up).astype(x_ref.dtype)
    acc_ref[...] += jnp.dot(hidden, wd_ref[...], preferred_element_type=jnp.float32)

    @pl.when(h_step == pl.num_programs(1) - 1)
    def _():
        o_ref[...] = acc_ref[...].astype(o_ref.dtype)


def swiglu_kernel_single(x_ref, wgu_ref, wd_ref, o_ref):
    # Single-H-tile variant: no f32 accumulator scratch, write straight to
    # o_ref (saves tm*D*4 bytes of VMEM + one VMEM round-trip; matters on v7x).
    x = x_ref[...]
    gu = jnp.dot(x, wgu_ref[...], preferred_element_type=jnp.float32)
    th = gu.shape[-1] // 2
    gate = gu[:, :th]
    up = gu[:, th:]
    hidden = (gate * jax.nn.sigmoid(gate) * up).astype(x_ref.dtype)
    o_ref[...] = jnp.dot(
        hidden, wd_ref[...], preferred_element_type=jnp.float32
    ).astype(o_ref.dtype)


# ---------------------------------------------------------------------------
# One-time weight preparation
# ---------------------------------------------------------------------------

def prepare_swiglu_weights(wg, wu, wd, *, th=512, weight_dtype=None):
    """One-time weight preparation (do this at load time, NOT per forward).

    wg, wu: torch nn.Linear layout (H, D)  -- gate / up projections
    wd:     torch nn.Linear layout (D, H)  -- down projection
    weight_dtype: optional storage dtype for the prepared weights (use
        jnp.bfloat16 in production: the kernel is HBM-bound on weight
        streaming, so halving weight bytes is ~2x at the memory roofline and
        halves per-block VMEM).

    Returns (wgu, wd_t, th):
      wgu  : (D, 2*Hp) with per-H-tile interleaved [gate_tile | up_tile] cols
      wd_t : (Hp, D)
      th   : hidden-tile size actually used (multiple of 128, divides Hp)
    """
    H, D = wg.shape
    # 128-multiple hidden tile -> the gate/up split lands exactly on a vreg
    # lane boundary (free selection, no cross-lane shuffles) and the
    # (th, D)/(D, 2*th) blocks stay layout-clean for bf16 as well.
    th = max(128, _round_up(min(th, _round_up(H, 128)), 128))
    Hp = _round_up(_round_up(H, 128), th)

    wg_t = jnp.asarray(wg).T  # (D, H)
    wu_t = jnp.asarray(wu).T  # (D, H)
    wd_t = jnp.asarray(wd).T  # (H, D)
    if weight_dtype is not None:
        wg_t = wg_t.astype(weight_dtype)
        wu_t = wu_t.astype(weight_dtype)
        wd_t = wd_t.astype(weight_dtype)

    if Hp != H:
        pad = Hp - H
        # Zero padding is exact: silu(0) * 0 = 0 and padded wd rows are 0.
        wg_t = jnp.pad(wg_t, ((0, 0), (0, pad)))
        wu_t = jnp.pad(wu_t, ((0, 0), (0, pad)))
        wd_t = jnp.pad(wd_t, ((0, pad), (0, 0)))

    n_tiles = Hp // th
    wgu = jnp.concatenate(
        [wg_t.reshape(D, n_tiles, th), wu_t.reshape(D, n_tiles, th)], axis=-1
    ).reshape(D, 2 * Hp)
    return wgu, wd_t, th


# ---------------------------------------------------------------------------
# VMEM budgeting helpers
# ---------------------------------------------------------------------------

def _physical_vmem_bytes():
    # Query the chip; fall back to 64 MiB (v7x per-TC VMEM, the smallest of
    # current generations) so an un-queryable environment still gets a safe
    # budget.
    try:
        info = pltpu.get_tpu_info()
        cap = getattr(info, "vmem_capacity_bytes", None)
        if cap:
            return int(cap)
    except Exception:
        pass
    return 64 * 1024 * 1024


def _vmem_footprint_bytes(tm, th, D, x_it, w_it, o_it, use_acc):
    b = 2 * tm * D * x_it              # x tile, double-buffered
    b += 2 * (2 * th) * D * w_it       # fused gate|up tile, double-buffered
    b += 2 * th * D * w_it             # down tile, double-buffered
    b += 2 * tm * D * o_it             # output tile, double-buffered
    if use_acc:
        b += tm * D * 4                # f32 accumulator scratch
    return b


# ---------------------------------------------------------------------------
# Forward wrapper
# ---------------------------------------------------------------------------

def swiglu_pallas(x, wgu, wd_t, th, *, tm=512, vmem_limit_bytes=None):
    """x: (..., D); wgu: (D, 2*Hp) prepared; wd_t: (Hp, D) prepared."""
    orig_shape = x.shape
    D = orig_shape[-1]
    Hp = wd_t.shape[0]
    assert wgu.shape == (D, 2 * Hp)
    assert Hp % th == 0
    n_h = Hp // th
    use_acc = n_h > 1

    xm = x.reshape(-1, D)
    M = xm.shape[0]

    x_it = xm.dtype.itemsize
    w_it = wgu.dtype.itemsize
    o_it = x.dtype.itemsize

    # Sublane-legal token tile: 8 (>=4B dtypes), 16 (2B), 32 (1B int8/fp8).
    sublane = 8 if x_it >= 4 else (16 if x_it == 2 else 32)
    tm = max(sublane, min(tm, _round_up(M, sublane)))
    tm = _round_up(tm, sublane)

    # Keep >= 2 M blocks when M permits so the "parallel" token axis gives
    # both v7x TensorCores work (and megacore sharding on v5e/v6e).
    if _cdiv(M, tm) < 2 and _round_up(M, sublane) >= 2 * sublane:
        tm = _round_up(_cdiv(M, 2), sublane)

    # Shrink tm until the tile footprint fits a conservative share of physical
    # VMEM (generation-aware: 128 MiB v5e/v6e, 64 MiB v7x).
    physical = _physical_vmem_bytes()
    budget = int(physical * 0.7)
    while (_vmem_footprint_bytes(tm, th, D, x_it, w_it, o_it, use_acc) > budget
           and tm > sublane):
        tm = max(sublane, _round_up(tm // 2, sublane))

    Mp = _round_up(M, tm)
    if Mp != M:
        xm = jnp.pad(xm, ((0, Mp - M), (0, 0)))
    n_m = Mp // tm

    # Always set the scoped-VMEM limit from the actual footprint (the 16/32
    # MiB defaults are too small for realistic tiles).
    if vmem_limit_bytes is None:
        need = _vmem_footprint_bytes(tm, th, D, x_it, w_it, o_it, use_acc)
        vmem_limit_bytes = min(
            physical, max(16 * 1024 * 1024, int(need * 1.3) + (2 << 20))
        )

    # HBM traffic includes weight re-streaming once per M tile.
    cost = pl.CostEstimate(
        flops=6 * Mp * D * Hp,
        transcendentals=Mp * Hp,
        bytes_accessed=(x_it * Mp * D + o_it * Mp * D
                        + n_m * w_it * 3 * D * Hp),
    )

    if use_acc:
        out = pl.pallas_call(
            swiglu_kernel_acc,
            out_shape=jax.ShapeDtypeStruct((Mp, D), x.dtype),
            grid_spec=pltpu.PrefetchScalarGridSpec(
                num_scalar_prefetch=0,
                grid=(n_m, n_h),
                in_specs=[
                    pl.BlockSpec((tm, D), lambda i, h: (i, 0)),        # x tile
                    pl.BlockSpec((D, 2 * th), lambda i, h: (0, h)),    # gate|up
                    pl.BlockSpec((th, D), lambda i, h: (h, 0)),        # down
                ],
                out_specs=pl.BlockSpec((tm, D), lambda i, h: (i, 0)),
                scratch_shapes=[pltpu.VMEM((tm, D), jnp.float32)],
            ),
            compiler_params=pltpu.CompilerParams(
                dimension_semantics=("parallel", "arbitrary"),
                vmem_limit_bytes=vmem_limit_bytes,
            ),
            cost_estimate=cost,
        )(xm, wgu, wd_t)
    else:
        out = pl.pallas_call(
            swiglu_kernel_single,
            out_shape=jax.ShapeDtypeStruct((Mp, D), x.dtype),
            grid_spec=pltpu.PrefetchScalarGridSpec(
                num_scalar_prefetch=0,
                grid=(n_m,),
                in_specs=[
                    pl.BlockSpec((tm, D), lambda i: (i, 0)),           # x tile
                    pl.BlockSpec((D, 2 * th), lambda i: (0, 0)),       # gate|up
                    pl.BlockSpec((th, D), lambda i: (0, 0)),           # down
                ],
                out_specs=pl.BlockSpec((tm, D), lambda i: (i, 0)),
            ),
            compiler_params=pltpu.CompilerParams(
                dimension_semantics=("parallel",),
                vmem_limit_bytes=vmem_limit_bytes,
            ),
            cost_estimate=cost,
        )(xm, wgu, wd_t)

    out = out[:M]
    return out.reshape(orig_shape)


def swiglu_ref(x, wg, wu, wd):
    gate = x @ wg.T
    up = x @ wu.T
    return (gate * jax.nn.sigmoid(gate) * up) @ wd.T


if __name__ == "__main__":
    # Small shapes consistent with the module: batch=2, seq=8, dim=32.
    B, S, D = 2, 8, 32
    key = jax.random.PRNGKey(0)
    kx, kg, ku, kd = jax.random.split(key, 4)

    x = jax.random.normal(kx, (B, S, D), dtype=jnp.float32)

    # ---- Test A: hidden=64 (single H tile -> scratch-free kernel path) ----
    H = 64
    wg = jax.random.normal(kg, (H, D), dtype=jnp.float32) * (1.0 / D**0.5)
    wu = jax.random.normal(ku, (H, D), dtype=jnp.float32) * (1.0 / D**0.5)
    wd = jax.random.normal(kd, (D, H), dtype=jnp.float32) * (1.0 / H**0.5)

    wgu, wd_t, th_a = prepare_swiglu_weights(wg, wu, wd, th=512)
    out_a = jax.block_until_ready(swiglu_pallas(x, wgu, wd_t, th_a, tm=512))
    ref_a = swiglu_ref(x, wg, wu, wd)
    assert out_a.shape == (B, S, D)
    assert jnp.allclose(out_a, ref_a, atol=1e-3, rtol=1e-3), "mismatch (single-H path)"

    # ---- Test B: hidden=256, th=128 (multi-step H reduction / f32 acc path) ----
    H2 = 256
    kg2, ku2, kd2 = jax.random.split(kg, 3)
    wg2 = jax.random.normal(kg2, (H2, D), dtype=jnp.float32) * (1.0 / D**0.5)
    wu2 = jax.random.normal(ku2, (H2, D), dtype=jnp.float32) * (1.0 / D**0.5)
    wd2 = jax.random.normal(kd2, (D, H2), dtype=jnp.float32) * (1.0 / H2**0.5)

    wgu2, wd2_t, th_b = prepare_swiglu_weights(wg2, wu2, wd2, th=128)
    out_b = jax.block_until_ready(swiglu_pallas(x, wgu2, wd2_t, th_b, tm=512))
    ref_b = swiglu_ref(x, wg2, wu2, wd2)
    assert jnp.allclose(out_b, ref_b, atol=1e-3, rtol=1e-3), "mismatch (acc path)"

    # ---- Test C: bf16 activations + bf16 prepared weights (mem-bound config) ----
    x_bf = x.astype(jnp.bfloat16)
    wgu_bf, wd_t_bf, th_c = prepare_swiglu_weights(
        wg, wu, wd, th=512, weight_dtype=jnp.bfloat16
    )
    out_c = jax.block_until_ready(swiglu_pallas(x_bf, wgu_bf, wd_t_bf, th_c, tm=512))
    ref_c = swiglu_ref(
        x_bf.astype(jnp.float32),
        wg.astype(jnp.bfloat16).astype(jnp.float32),
        wu.astype(jnp.bfloat16).astype(jnp.float32),
        wd.astype(jnp.bfloat16).astype(jnp.float32),
    )
    assert jnp.allclose(out_c.astype(jnp.float32), ref_c, atol=1e-1, rtol=1e-1), (
        "mismatch (bf16 path)"
    )

    print("KERNEL_OK")
</pallas_src>

<mosaic_0001>
module attributes {stable_mosaic.version = 11 : i64} {
  func.func @swiglu_kernel_single(%arg0: i32, %arg1: memref<8x32xf32, #tpu.memory_space<vmem>>, %arg2: memref<32x256xf32, #tpu.memory_space<vmem>>, %arg3: memref<128x32xf32, #tpu.memory_space<vmem>>, %arg4: memref<8x32xf32, #tpu.memory_space<vmem>>) attributes {dimension_semantics = [#tpu.dimension_semantics<parallel>], iteration_bounds = array<i64: 2>, scalar_prefetch = 0 : i64, scratch_operands = 0 : i64, tpu.core_type = #tpu.core_type<tc>, window_params = [{transform_indices = @transform_0, window_bounds = array<i64: 8, 32>}, {pipeline_mode = #tpu.pipeline_mode<synchronous>, transform_indices = @transform_1, window_bounds = array<i64: 32, 256>}, {pipeline_mode = #tpu.pipeline_mode<synchronous>, transform_indices = @transform_2, window_bounds = array<i64: 128, 32>}, {transform_indices = @transform_3, window_bounds = array<i64: 8, 32>}]} {
    %c0 = arith.constant 0 : index
    %c0_0 = arith.constant 0 : index
    %0 = vector.load %arg1[%c0, %c0_0] : memref<8x32xf32, #tpu.memory_space<vmem>>, vector<8x32xf32>
    %c0_1 = arith.constant 0 : index
    %c0_2 = arith.constant 0 : index
    %1 = vector.load %arg2[%c0_1, %c0_2] : memref<32x256xf32, #tpu.memory_space<vmem>>, vector<32x256xf32>
    %cst = arith.constant dense<0.000000e+00> : vector<8x256xf32>
    %2 = tpu.matmul %0, %1, %cst {dimension_numbers = #tpu.dot_dimension_numbers<[1], [0], [0], [1], [0, 0, 1, 1], [], []>} : vector<8x32xf32>, vector<32x256xf32>, vector<8x256xf32> -> vector<8x256xf32>
    %3 = vector.extract_strided_slice %2 {offsets = [0, 0], sizes = [8, 128], strides = [1, 1]} : vector<8x256xf32> to vector<8x128xf32>
    %4 = vector.extract_strided_slice %2 {offsets = [0, 128], sizes = [8, 128], strides = [1, 1]} : vector<8x256xf32> to vector<8x128xf32>
    %5 = arith.negf %3 : vector<8x128xf32>
    %6 = math.exp %5 : vector<8x128xf32>
    %cst_3 = arith.constant 1.000000e+00 : f32
    %7 = vector.broadcast %cst_3 : f32 to vector<8x128xf32>
    %8 = arith.addf %7, %6 : vector<8x128xf32>
    %9 = arith.divf %7, %8 : vector<8x128xf32>
    %10 = arith.mulf %3, %9 : vector<8x128xf32>
    %11 = arith.mulf %10, %4 : vector<8x128xf32>
    %c0_4 = arith.constant 0 : index
    %c0_5 = arith.constant 0 : index
    %12 = vector.load %arg3[%c0_4, %c0_5] : memref<128x32xf32, #tpu.memory_space<vmem>>, vector<128x32xf32>
    %cst_6 = arith.constant dense<0.000000e+00> : vector<8x32xf32>
    %13 = tpu.matmul %11, %12, %cst_6 {dimension_numbers = #tpu.dot_dimension_numbers<[1], [0], [0], [1], [0, 0, 1, 1], [], []>} : vector<8x128xf32>, vector<128x32xf32>, vector<8x32xf32> -> vector<8x32xf32>
    %c0_7 = arith.constant 0 : index
    %c0_8 = arith.constant 0 : index
    %14 = vector.load %arg4[%c0_7, %c0_8] : memref<8x32xf32, #tpu.memory_space<vmem>>, vector<8x32xf32>
    tpu.vector_store %arg4[%c0_7, %c0_8], %13 {strides = array<i32>} : memref<8x32xf32, #tpu.memory_space<vmem>>, vector<8x32xf32>,
    return
  }
  func.func @transform_0(%arg0: i32) -> (i32, i32) {
    %c0_i32 = arith.constant 0 : i32
    %c0_i32_0 = arith.constant 0 : i32
    return %arg0, %c0_i32 : i32, i32
  }
  func.func @transform_1(%arg0: i32) -> (i32, i32) {
    %c0_i32 = arith.constant 0 : i32
    %c0_i32_0 = arith.constant 0 : i32
    %c0_i32_1 = arith.constant 0 : i32
    return %c0_i32, %c0_i32_0 : i32, i32
  }
  func.func @transform_2(%arg0: i32) -> (i32, i32) {
    %c0_i32 = arith.constant 0 : i32
    %c0_i32_0 = arith.constant 0 : i32
    %c0_i32_1 = arith.constant 0 : i32
    return %c0_i32, %c0_i32_0 : i32, i32
  }
  func.func @transform_3(%arg0: i32) -> (i32, i32) {
    %c0_i32 = arith.constant 0 : i32
    %c0_i32_0 = arith.constant 0 : i32
    return %arg0, %c0_i32 : i32, i32
  }
}

</mosaic_0001>

<llo_original>
// kernel: tpu_custom_call.1
$region0: #{tpu_custom_call.1}
  #allocation0 [shape = 'u32[]', space=smem, size = 0x4, offset = 0x4, fixed_abs, tag = 'smem constant byte address 0x4 - core index']
  #allocation1 [shape = 'u32[144,128]{1,0:T(1,128)}', space=vmem, size = 0x12000, scoped, tag = 'internal scratch']
  %s0 = inlined_call_operand.vmem [shape: f32[16,32], index: 0, kind: input, shape index: {}]
  %s1 = inlined_call_operand.vmem [shape: f32[32,256], index: 1, kind: input, shape index: {}]
  %s2 = inlined_call_operand.vmem [shape: f32[128,32], index: 2, kind: input, shape index: {}]
  %s3 = inlined_call_operand.hbm [shape: f32[16,32], index: 3, kind: output, shape index: {}]
  %s4 = sld [smem:[#allocation0]]
  $region45: #{tpu_custom_call.1} parent=0
    _
  %s6 = ssub.s32 1, %s4
  %s7 = scalar_select 0, %s6, %s4
  $region1: #{tpu_custom_call.1} parent=0
    #allocation2 [shape = 'u8[8192]{0}', space=vmem, size = 0x2000, scoped, tag = 'output window, operand 0']
    #allocation3 [shape = 's32[2]{0}', space=sflag, size = 0x8, scoped, tag = 'scoped memory for tpu_custom_call.1']
    %8 = vsyncpa [#allocation3], 0
    %s9 = scalar_lea.sflag [#allocation3], 1
    %10 = vsyncpa %s9, 0
    loop: start=0, step=1, limit=4
    $region2: #{tpu_custom_call.1} parent=1 // loop_pre_header
      _
    $region3: #{tpu_custom_call.1} parent=1 // loop_header
      %s12 = sphi 0, %s16
      %p13 = scmp.ge.s32.totalorder %s12, 4
      %s22 = sphi 0, %s24
      %s25 = sphi 0, %s22
      %s26 = sphi 0, %s25
      %s42 = sphi 0, %s26
      %s46 = sphi 0, %s46
      %s48 = sphi 0, %s46
      %s49 = sphi 0, %s48
      %s63 = sphi 0, %s49
      %s67 = sphi 0, %s67
      %s69 = sphi 0, %s67
      %s70 = sphi 0, %s69
      %s84 = sphi 0, %s70
      %s90 = sphi 0, %s92
      %s93 = sphi 0, %s90
      %s94 = sphi 0, %s93
      %s110 = sphi 0, %s94
    $region4: #{tpu_custom_call.1} parent=1 // loop_header_branch
      %15 = sbr.rel (%p13) target = $region8
    $region5: #{tpu_custom_call.1} parent=1 // loop_body
      %s17 = ssub.s32 %s12, 1
      %s18 = ssub.s32 %s12, 2
      %s19 = sadd.s32 %s12, 1
      %s20 = ssub.s32 %s12, %s19
      %p21 = scmp.eq.s32.totalorder %s20, 0
      %s23 = sadd.s32 %s22, 1
      %s24 = scalar_select %p21, %s22, %s23
      %p27 = pneg %p21
      %p28 = scmp.eq.s32.totalorder %s12, 1
      %p29 = por %p27, %p28
      %p30 = scmp.ne.s32.totalorder %s22, %s25
      %p31 = scmp.eq.s32.totalorder %s12, 0
      %p32 = por %p30, %p31
      %p33 = scmp.ne.s32.totalorder %s22, %s25
      %p34 = scmp.eq.s32.totalorder %s17, 1
      %p35 = por %p33, %p34
      %p36 = scmp.ne.s32.totalorder %s25, %s26
      %p37 = scmp.eq.s32.totalorder %s17, 0
      %p38 = por %p36, %p37
      %p39 = scmp.ne.s32.totalorder %s25, %s26
      %p40 = scmp.eq.s32.totalorder %s18, 1
      %p41 = por %p39, %p40
      %p43 = scmp.ne.s32.totalorder %s26, %s42
      %p44 = scmp.eq.s32.totalorder %s18, 0
      %p45 = por %p43, %p44
      %s47 = sadd.s32 %s46, 1
      %p50 = scmp.eq.s32.totalorder %s12, 1
      %p51 = scmp.ne.s32.totalorder %s46, %s48
      %p52 = scmp.eq.s32.totalorder %s12, 0
      %p53 = por %p51, %p52
      %p54 = scmp.ne.s32.totalorder %s46, %s48
      %p55 = scmp.eq.s32.totalorder %s17, 1
      %p56 = por %p54, %p55
      %p57 = scmp.ne.s32.totalorder %s48, %s49
      %p58 = scmp.eq.s32.totalorder %s17, 0
      %p59 = por %p57, %p58
      %p60 = scmp.ne.s32.totalorder %s48, %s49
      %p61 = scmp.eq.s32.totalorder %s18, 1
      %p62 = por %p60, %p61
      %p64 = scmp.ne.s32.totalorder %s49, %s63
      %p65 = scmp.eq.s32.totalorder %s18, 0
      %p66 = por %p64, %p65
      %s68 = sadd.s32 %s67, 1
      %p71 = scmp.eq.s32.totalorder %s12, 1
      %p72 = scmp.ne.s32.totalorder %s67, %s69
      %p73 = scmp.eq.s32.totalorder %s12, 0
      %p74 = por %p72, %p73
      %p75 = scmp.ne.s32.totalorder %s67, %s69
      %p76 = scmp.eq.s32.totalorder %s17, 1
      %p77 = por %p75, %p76
      %p78 = scmp.ne.s32.totalorder %s69, %s70
      %p79 = scmp.eq.s32.totalorder %s17, 0
      %p80 = por %p78, %p79
      %p81 = scmp.ne.s32.totalorder %s69, %s70
      %p82 = scmp.eq.s32.totalorder %s18, 1
      %p83 = por %p81, %p82
      %p85 = scmp.ne.s32.totalorder %s70, %s84
      %p86 = scmp.eq.s32.totalorder %s18, 0
      %p87 = por %p85, %p86
      %s88 = ssub.s32 %s12, %s19
      %p89 = scmp.eq.s32.totalorder %s88, 0
      %s91 = sadd.s32 %s90, 1
      %s92 = scalar_select %p89, %s90, %s91
      %p95 = pneg %p89
      %p96 = scmp.eq.s32.totalorder %s12, 1
      %p97 = por %p95, %p96
      %p98 = scmp.ne.s32.totalorder %s90, %s93
      %p99 = scmp.eq.s32.totalorder %s12, 0
      %p100 = por %p98, %p99
      %p101 = scmp.ne.s32.totalorder %s90, %s93
      %p102 = scmp.eq.s32.totalorder %s17, 1
      %p103 = por %p101, %p102
      %p104 = scmp.ne.s32.totalorder %s93, %s94
      %p105 = scmp.eq.s32.totalorder %s17, 0
      %p106 = por %p104, %p105
      %p107 = scmp.ne.s32.totalorder %s93, %s94
      %p108 = scmp.eq.s32.totalorder %s18, 1
      %p109 = por %p107, %p108
      %p111 = scmp.ne.s32.totalorder %s94, %s110
      %p112 = scmp.eq.s32.totalorder %s18, 0
      %p113 = por %p111, %p112
      %p114 = scmp.le.s32.totalorder 1, %s12
      %p115 = scmp.lt.s32.totalorder %s12, 3
      %p116 = pnand %p114, %p115
      %p117 = pneg %p116
      // Predicated region
      $region9: #{tpu_custom_call.1} parent=5 // pred_check
        _
      $region10: #{tpu_custom_call.1} parent=5 // pred_check_branch
        %119 = sbr.rel (%p116) target = $region12
      $region11: #{tpu_custom_call.1} parent=5 // pred_region
        %s120 = ssub.s32 %s12, 1
        // Predicated region
        $region13: #{tpu_custom_call.1} parent=11 // pred_check
          %p121 = pneg %p59
        $region14: #{tpu_custom_call.1} parent=11 // pred_check_branch
          %123 = sbr.rel (%p121) target = $region16
        $region15: #{tpu_custom_call.1} parent=11 // pred_region
          _
        $region16: #{tpu_custom_call.1} parent=11 // pred_fallthru
          _
        // Predicated region
        $region17: #{tpu_custom_call.1} parent=11 // pred_check
          %p124 = pneg %p80
        $region18: #{tpu_custom_call.1} parent=11 // pred_check_branch
          %126 = sbr.rel (%p124) target = $region20
        $region19: #{tpu_custom_call.1} parent=11 // pred_region
          _
        $region20: #{tpu_custom_call.1} parent=11 // pred_fallthru
          _
      $region12: #{tpu_custom_call.1} parent=5 // pred_fallthru
        _
      %p127 = scmp.lt.s32.totalorder %s12, 2
      // Predicated region
      $region21: #{tpu_custom_call.1} parent=5 // pred_check
        %p128 = pneg %p127
      $region22: #{tpu_custom_call.1} parent=5 // pred_check_branch
        %130 = sbr.rel (%p128) target = $region24
      $region23: #{tpu_custom_call.1} parent=5 // pred_region
        // Predicated region
        $region25: #{tpu_custom_call.1} parent=23 // pred_check
          %p131 = pneg %p32
        $region26: #{tpu_custom_call.1} parent=23 // pred_check_branch
          %133 = sbr.rel (%p131) target = $region28
        $region27: #{tpu_custom_call.1} parent=23 // pred_region
          %p134 = scmp.lt.s32.totalorder %s12, 1
          %s135 = scalar_select %p134, %s12, 1
          %s136 = smul.addr %s135, 8
          %s137 = scalar_lea.vmem %s0, %s136
        $region28: #{tpu_custom_call.1} parent=23 // pred_fallthru
          _
      $region24: #{tpu_custom_call.1} parent=5 // pred_fallthru
        _
      %p138 = scmp.le.s32.totalorder 1, %s12
      %p139 = scmp.lt.s32.totalorder %s12, 3
      %p140 = pnand %p138, %p139
      %p141 = pneg %p140
      // Predicated region
      $region29: #{tpu_custom_call.1} parent=5 // pred_check
        _
      $region30: #{tpu_custom_call.1} parent=5 // pred_check_branch
        %143 = sbr.rel (%p140) target = $region32
      $region31: #{tpu_custom_call.1} parent=5 // pred_region
        %s144 = ssub.s32 %s12, 1
        %p145 = scmp.lt.s32.totalorder %s17, 1
        %s146 = scalar_select %p145, %s17, 1
        %s147 = smul.addr %s146, 8
        %s148 = scalar_lea.vmem %s0, %s147
        %p149 = pneg %p38
        %p150 = pneg %p35
        %p151 = pneg %p59
        %p152 = pneg %p56
        %p153 = pneg %p80
        %p154 = pneg %p77
        %p155 = pneg %p106
        %p156 = pneg %p103
        %s157 = sand.u32 %s93, 1
        %s158 = scalar_lea.sflag [#allocation3], %s157
        %s159 = sand.u32 %s93, 1
        %s160 = smul.addr %s159, 8
        %s161 = scalar_lea.vmem [#allocation2], %s160
        %p162 = scmp.lt.s32.totalorder %s17, 1
        %s163 = scalar_select %p162, %s17, 1
        %s164 = smul.addr %s163, 8
        %s165 = scalar_lea.vmem %s0, %s164
        %v166 = vld [vmem:[%s165] sm:$0xff]
        %v167 = vld [vmem:[%s1] sm:$0xff]
        %v168 = vld [vmem:[%s1 + $0x8] sm:$0xff]
        %v169 = vld [vmem:[%s1 + $0x10] sm:$0xff]
        %v170 = vld [vmem:[%s1 + $0x18] sm:$0xff]
        %v171 = vld [vmem:[%s1 + $0x20] sm:$0xff]
        %v172 = vld [vmem:[%s1 + $0x28] sm:$0xff]
        %v173 = vld [vmem:[%s1 + $0x30] sm:$0xff]
        %v174 = vld [vmem:[%s1 + $0x38] sm:$0xff]
        %vm175 = vcmask 261120
        %v177 = vsel %vm175, %v166, 0
        %179 = vmatprep.subr.mxu0 %v168
        %180 = vmatpush1.msra.mxu0 %v167
        %181 = vmatprep.subr.mxu0 %v170
        %182 = vmatpush1.msra.mxu0 %v169
        %183 = vmatprep.subr.mxu0 %v172
        %184 = vmatpush1.msra.mxu0 %v171
        %185 = vmatprep.subr.mxu0 %v174
        %186 = vmatpush1.msra.mxu0 %v173
        %187 = vmatprep.subr.mxu0 0.0
        %188 = vmatpush1.msra.mxu0 0.0
        %189 = vmatprep.subr.mxu0 0.0
        %190 = vmatpush1.msra.mxu0 0.0
        %191 = vmatprep.subr.mxu0 0.0
        %192 = vmatpush1.msra.mxu0 0.0
        %193 = vmatprep.subr.mxu0 0.0
        %194 = vmatpush1.msra.mxu0 0.0
        %195 = vmatprep.subr.mxu0 0.0
        %196 = vmatpush1.msra.mxu0 0.0
        %197 = vmatprep.subr.mxu0 0.0
        %198 = vmatpush1.msra.mxu0 0.0
        %199 = vmatprep.subr.mxu0 0.0
        %200 = vmatpush1.msra.mxu0 0.0
        %201 = vmatprep.subr.mxu0 0.0
        %202 = vmatpush1.msra.mxu0 0.0
        %203 = vmatprep.subr.mxu0 0.0
        %204 = vmatpush1.msra.mxu0 0.0
        %205 = vmatprep.subr.mxu0 0.0
        %206 = vmatpush1.msra.mxu0 0.0
        %207 = vmatprep.subr.mxu0 0.0
        %208 = vmatpush1.msra.mxu0 0.0
        %209 = vmatprep.subr.mxu0 0.0
        %210 = vmatpush1.msra.mxu0 0.0
        %211 = vmatprep.subr.mxu0 0.0
        %212 = vmatpush1.msra.mxu0 0.0
        %213 = vmatprep.subr.mxu0 0.0
        %214 = vmatpush1.msra.mxu0 0.0
        %215 = vmatprep.subr.mxu0 0.0
        %216 = vmatpush1.msra.mxu0 0.0
        %217 = vmatprep.subr.mxu0 0.0
        %218 = vmatpush1.msra.mxu0 0.0
        %219 = vmatprep.subr.mxu0 0.0
        %220 = vmatpush1.msra.mxu0 0.0
        %221 = vmatprep.subr.mxu0 0.0
        %222 = vmatpush1.msra.mxu0 0.0
        %223 = vmatprep.subr.mxu0 0.0
        %224 = vmatpush1.msra.mxu0 0.0
        %225 = vmatprep.subr.mxu0 0.0
        %226 = vmatpush1.msra.mxu0 0.0
        %227 = vmatprep.subr.mxu0 0.0
        %228 = vmatpush1.msra.mxu0 0.0
        %229 = vmatprep.subr.mxu0 0.0
        %230 = vmatpush1.msra.mxu0 0.0
        %231 = vmatprep.subr.mxu0 0.0
        %232 = vmatpush1.msra.mxu0 0.0
        %233 = vmatprep.subr.mxu0 0.0
        %234 = vmatpush1.msra.mxu0 0.0
        %235 = vmatprep.subr.mxu0 0.0
        %236 = vmatpush1.msra.mxu0 0.0
        %237 = vmatprep.subr.mxu0 0.0
        %238 = vmatpush1.msra.mxu0 0.0
        %239 = vmatprep.subr.mxu0 0.0
        %240 = vmatpush1.msra.mxu0 0.0
        %241 = vmatprep.subr.mxu0 0.0
        %242 = vmatpush1.msra.mxu0 0.0
        %243 = vmatprep.mubr.f32.mxu0 0.0
        %244 = vmatmul.mubr.f32.gmra.mrb[0].mxu0 %v177
        %v245 = vpop.f32.mrb[0].mxu0
        %v246 = vadd.f32 0.0, %v245
        %v247 = vpop.f32.mrb[0].mxu0
        %v248 = vadd.f32 0.0, %v247
        %249 = vdwg.mxu0
        %v250 = vxor.u32 %v246, 2147483648
        %v251 = vmul.f32 %v250, 1.442695
        %v252 = vpow.pop %v251
        %v253 = vadd.f32 %v252, 1.0
        %v254 = vrcp.pop %v253
        %v255 = vmul.f32 1.0, %v254
        %v256 = vmul.f32 %v246, %v255
        %v257 = vmul.f32 %v256, %v248
        %v258 = vld [vmem:[%s2] sm:$0xff]
        %v259 = vld [vmem:[%s2 + $0x8] sm:$0xff]
        %v260 = vld [vmem:[%s2 + $0x10] sm:$0xff]
        %v261 = vld [vmem:[%s2 + $0x18] sm:$0xff]
        %v262 = vld [vmem:[%s2 + $0x20] sm:$0xff]
        %v263 = vld [vmem:[%s2 + $0x28] sm:$0xff]
        %v264 = vld [vmem:[%s2 + $0x30] sm:$0xff]
        %v265 = vld [vmem:[%s2 + $0x38] sm:$0xff]
        %v266 = vld [vmem:[%s2 + $0x40] sm:$0xff]
        %v267 = vld [vmem:[%s2 + $0x48] sm:$0xff]
        %v268 = vld [vmem:[%s2 + $0x50] sm:$0xff]
        %v269 = vld [vmem:[%s2 + $0x58] sm:$0xff]
        %v270 = vld [vmem:[%s2 + $0x60] sm:$0xff]
        %v271 = vld [vmem:[%s2 + $0x68] sm:$0xff]
        %v272 = vld [vmem:[%s2 + $0x70] sm:$0xff]
        %v273 = vld [vmem:[%s2 + $0x78] sm:$0xff]
        %274 = vmatprep.subr.mxu0 0.0
        %275 = vmatpush1.msra.mxu0 %v258
        %276 = vmatprep.subr.mxu0 0.0
        %277 = vmatpush1.msra.mxu0 %v259
        %278 = vmatprep.subr.mxu0 0.0
        %279 = vmatpush1.msra.mxu0 %v260
        %280 = vmatprep.subr.mxu0 0.0
        %281 = vmatpush1.msra.mxu0 %v261
        %282 = vmatprep.subr.mxu0 0.0
        %283 = vmatpush1.msra.mxu0 %v262
        %284 = vmatprep.subr.mxu0 0.0
        %285 = vmatpush1.msra.mxu0 %v263
        %286 = vmatprep.subr.mxu0 0.0
        %287 = vmatpush1.msra.mxu0 %v264
        %288 = vmatprep.subr.mxu0 0.0
        %289 = vmatpush1.msra.mxu0 %v265
        %290 = vmatprep.subr.mxu0 0.0
        %291 = vmatpush1.msra.mxu0 %v266
        %292 = vmatprep.subr.mxu0 0.0
        %293 = vmatpush1.msra.mxu0 %v267
        %294 = vmatprep.subr.mxu0 0.0
        %295 = vmatpush1.msra.mxu0 %v268
        %296 = vmatprep.subr.mxu0 0.0
        %297 = vmatpush1.msra.mxu0 %v269
        %298 = vmatprep.subr.mxu0 0.0
        %299 = vmatpush1.msra.mxu0 %v270
        %300 = vmatprep.subr.mxu0 0.0
        %301 = vmatpush1.msra.mxu0 %v271
        %302 = vmatprep.subr.mxu0 0.0
        %303 = vmatpush1.msra.mxu0 %v272
        %304 = vmatprep.subr.mxu0 0.0
        %305 = vmatpush1.msra.mxu0 %v273
        %306 = vmatprep.subr.mxu0 0.0
        %307 = vmatpush1.msra.mxu0 0.0
        %308 = vmatprep.subr.mxu0 0.0
        %309 = vmatpush1.msra.mxu0 0.0
        %310 = vmatprep.subr.mxu0 0.0
        %311 = vmatpush1.msra.mxu0 0.0
        %312 = vmatprep.subr.mxu0 0.0
        %313 = vmatpush1.msra.mxu0 0.0
        %314 = vmatprep.subr.mxu0 0.0
        %315 = vmatpush1.msra.mxu0 0.0
        %316 = vmatprep.subr.mxu0 0.0
        %317 = vmatpush1.msra.mxu0 0.0
        %318 = vmatprep.subr.mxu0 0.0
        %319 = vmatpush1.msra.mxu0 0.0
        %320 = vmatprep.subr.mxu0 0.0
        %321 = vmatpush1.msra.mxu0 0.0
        %322 = vmatprep.subr.mxu0 0.0
        %323 = vmatpush1.msra.mxu0 0.0
        %324 = vmatprep.subr.mxu0 0.0
        %325 = vmatpush1.msra.mxu0 0.0
        %326 = vmatprep.subr.mxu0 0.0
        %327 = vmatpush1.msra.mxu0 0.0
        %328 = vmatprep.subr.mxu0 0.0
        %329 = vmatpush1.msra.mxu0 0.0
        %330 = vmatprep.subr.mxu0 0.0
        %331 = vmatpush1.msra.mxu0 0.0
        %332 = vmatprep.subr.mxu0 0.0
        %333 = vmatpush1.msra.mxu0 0.0
        %334 = vmatprep.subr.mxu0 0.0
        %335 = vmatpush1.msra.mxu0 0.0
        %336 = vmatprep.subr.mxu0 0.0
        %337 = vmatpush1.msra.mxu0 0.0
        %338 = vmatprep.mubr.f32.mxu0 0.0
        %339 = vmatmul.mubr.f32.gmra.mrb[0].mxu0 %v257
        %v340 = vpop.f32.mrb[0].mxu0
        %v341 = vadd.f32 0.0, %v340
        %v342 = vpop.f32.mrb[0].mxu0
        %343 = vdwg.mxu0
        %344 = vst.msk [vmem:[%s161] sm:$0xff] %vm175, %v341
        %s345 = sand.u32 %s93, 1
        %s346 = scalar_lea.sflag [#allocation3], %s345
        %s347 = sand.u32 %s93, 1
        %s348 = smul.addr %s347, 8
        %s349 = scalar_lea.vmem [#allocation2], %s348
        // Predicated region
        $region33: #{tpu_custom_call.1} parent=31 // pred_check
          %p350 = pneg %p103
        $region34: #{tpu_custom_call.1} parent=31 // pred_check_branch
          %352 = sbr.rel (%p350) target = $region36
        $region35: #{tpu_custom_call.1} parent=31 // pred_region
          %s354 = ssub.s32 128, 128
          %355 = vsyncadd %s346, %s354
          %s356 = smul.addr %s17, 128
          %s357 = scalar_lea.hbm %s3, %s356
          %s359 = sshll.u32 %s349, 4
          %s360 = int_to_ptr.vmem [resolvable:$true] %s359
          %362 = dma.vmem_to_hbm [thread:$0]  %s360, 128, %s357, %s346
        $region36: #{tpu_custom_call.1} parent=31 // pred_fallthru
          _
      $region32: #{tpu_custom_call.1} parent=5 // pred_fallthru
        _
      %p363 = scmp.le.s32.totalorder 2, %s12
      // Predicated region
      $region37: #{tpu_custom_call.1} parent=5 // pred_check
        %p364 = pneg %p363
      $region38: #{tpu_custom_call.1} parent=5 // pred_check_branch
        %366 = sbr.rel (%p364) target = $region40
      $region39: #{tpu_custom_call.1} parent=5 // pred_region
        %s367 = ssub.s32 %s12, 2
        // Predicated region
        $region41: #{tpu_custom_call.1} parent=39 // pred_check
          %p368 = pneg %p109
        $region42: #{tpu_custom_call.1} parent=39 // pred_check_branch
          %370 = sbr.rel (%p368) target = $region44
        $region43: #{tpu_custom_call.1} parent=39 // pred_region
          %s371 = sand.u32 %s94, 1
          %s372 = scalar_lea.sflag [#allocation3], %s371
          %s373 = sand.u32 %s94, 1
          %s374 = smul.addr %s373, 8
          %s375 = scalar_lea.vmem [#allocation2], %s374
          %376 = dma.done %s372, 128
        $region44: #{tpu_custom_call.1} parent=39 // pred_fallthru
          _
      $region40: #{tpu_custom_call.1} parent=5 // pred_fallthru
        _
    $region6: #{tpu_custom_call.1} parent=1 // loop_footer
      %s16 = sadd.s32 1, %s12
    $region7: #{tpu_custom_call.1} parent=1 // loop_footer_branch
      %11 = sbr.rel target = $region3
    $region8: #{tpu_custom_call.1} parent=1 // loop_exit
      _
    %377 = vsyncpa [#allocation3], 1
    %s378 = scalar_lea.sflag [#allocation3], 1
    %379 = vsyncpa %s378, 1

</llo_original>
